<compile_context>
chip_gen: v5e
topology: v5e:2x2
jax: 0.10.0
libtpu: 0.0.40
codegen_flags: <defaults>
</compile_context>

<pallas_src>
import jax
import jax.numpy as jnp
from jax.experimental import pallas as pl
from jax.experimental.pallas import tpu as pltpu


def rotary_kernel(xq_ref, xk_ref, cos_ref, coef_ref, oq_ref, ok_ref):
    # xq_ref : (H,  TS, D)   xk_ref : (Hk, TS, D)
    # cos_ref / coef_ref : (TS, D) in the activation dtype
    d_dim = xq_ref.shape[-1]
    ts = cos_ref.shape[0]

    cos = cos_ref[...].astype(jnp.float32)[None, :, :]    # broadcast over heads
    coef = coef_ref[...].astype(jnp.float32)[None, :, :]  # signed swapped-sin

    # Even/odd lane mask, hoisted once per grid step (VPU slack is large).
    lane = jax.lax.broadcasted_iota(jnp.int32, (1, ts, d_dim), 2)
    is_even = (lane % 2) == 0

    def apply(x_ref, o_ref):
        x = x_ref[...].astype(jnp.float32)
        x_next = pltpu.roll(x, d_dim - 1, axis=2)   # lane d gets x[d+1]
        x_prev = pltpu.roll(x, 1, axis=2)           # lane d gets x[d-1]
        # x[d^1]: even lanes take x[d+1], odd lanes take x[d-1].  Wrap-around
        # lanes (0 picks x[D-1], D-1 picks x[0]) are never selected.
        swapped = jnp.where(is_even, x_next, x_prev)
        out = x * cos + swapped * coef
        o_ref[...] = out.astype(o_ref.dtype)

    apply(xq_ref, oq_ref)
    apply(xk_ref, ok_ref)


def _pick_seq_tile(S, H, Hk, D, act_bytes, tab_bytes,
                   target=512, vmem_budget_bytes=12 * 2**20):
    """Largest seq_tile that divides S, is a multiple of 8, fits a conservative
    VMEM budget (double-buffered in+out+tables), and — when S allows — leaves
    at least 2 grid steps so both v7x TensorCores get work."""
    cands = [t for t in range(8, S + 1, 8) if S % t == 0]
    if not cands:
        cands = [S]

    def per_step_bytes(t):
        act = (H + Hk) * t * D * act_bytes * 2      # inputs + outputs
        tab = 2 * t * D * tab_bytes                 # cos + coef
        return 2 * (act + tab)                      # double-buffered

    # Prefer >= 2 grid steps (megacore on v7x) when a valid tile <= S/2 exists.
    two_step = [t for t in cands if t <= S // 2]
    pool = two_step if two_step else cands

    fitting = [t for t in pool if t <= target and per_step_bytes(t) <= vmem_budget_bytes]
    if fitting:
        return max(fitting)
    fitting = [t for t in pool if per_step_bytes(t) <= vmem_budget_bytes]
    if fitting:
        return max(fitting)
    return min(pool)


def tt_llama_rotary(xq, xk, rot_mat, *, seq_tile=None):
    """xq: (1,H,S,D), xk: (1,Hk,S,D), rot_mat: (1,S,D,D) -> (out_q, out_k)."""
    B, H, S, D = xq.shape
    _, Hk, _, _ = xk.shape
    assert B == 1 and rot_mat.shape == (1, S, D, D)
    assert D % 2 == 0

    xq3, xk3, rot3 = xq[0], xk[0], rot_mat[0]
    act_bytes = jnp.dtype(xq.dtype).itemsize
    tab_dtype = xq.dtype
    tab_bytes = jnp.dtype(tab_dtype).itemsize

    if seq_tile is None:
        seq_tile = _pick_seq_tile(S, H, Hk, D, act_bytes, tab_bytes)
    seq_tile = min(seq_tile, S)
    assert S % seq_tile == 0
    assert seq_tile % 8 == 0 or seq_tile == S

    # One-time extraction of the rotary tables from rot_mat (pure XLA, outside
    # the kernel).  Assumes the interleaved-pair rotary structure produced by
    # TtLlamaRotary: only R[d, d] and R[d^1, d] are nonzero, so
    #   (x @ R)[d] == x[d]*R[d,d] + x[d^1]*R[d^1,d].
    d_idx = jnp.arange(D)
    partner = d_idx ^ 1
    cos = rot3[:, d_idx, d_idx].astype(tab_dtype)     # (S, D)  R[d, d]
    coef = rot3[:, partner, d_idx].astype(tab_dtype)  # (S, D)  R[d^1, d]

    out_q, out_k = pl.pallas_call(
        rotary_kernel,
        out_shape=(
            jax.ShapeDtypeStruct((H, S, D), xq.dtype),
            jax.ShapeDtypeStruct((Hk, S, D), xk.dtype),
        ),
        grid_spec=pltpu.PrefetchScalarGridSpec(
            num_scalar_prefetch=0,
            grid=(S // seq_tile,),
            in_specs=[
                pl.BlockSpec((H, seq_tile, D), lambda s: (0, s, 0)),
                pl.BlockSpec((Hk, seq_tile, D), lambda s: (0, s, 0)),
                pl.BlockSpec((seq_tile, D), lambda s: (s, 0)),
                pl.BlockSpec((seq_tile, D), lambda s: (s, 0)),
            ],
            out_specs=[
                pl.BlockSpec((H, seq_tile, D), lambda s: (0, s, 0)),
                pl.BlockSpec((Hk, seq_tile, D), lambda s: (0, s, 0)),
            ],
        ),
        compiler_params=pltpu.CompilerParams(
            dimension_semantics=("parallel",),
        ),
    )(xq3, xk3, cos, coef)

    return out_q[None], out_k[None]


def _rotation_matrices(seq, head_dim, base=10000.0, dtype=jnp.float32):
    """Deterministic per-position interleaved-pair rotary matrices (D x D)."""
    half = head_dim // 2
    inv_freq = 1.0 / (base ** (jnp.arange(0, half, dtype=jnp.float32) / half))
    t = jnp.arange(seq, dtype=jnp.float32)
    theta = jnp.einsum("s,f->sf", t, inv_freq)            # (S, D/2)
    cos, sin = jnp.cos(theta), jnp.sin(theta)
    d = jnp.arange(head_dim)
    eye = (d[:, None] == d[None, :]).astype(jnp.float32)
    pair = jnp.where((d[:, None] // 2) == (d[None, :] // 2), 1.0, 0.0) - eye
    cos_full = jnp.repeat(cos, 2, axis=-1)                # (S, D)
    sin_full = jnp.repeat(sin, 2, axis=-1)                # (S, D)
    sign = jnp.where(d % 2 == 0, 1.0, -1.0)               # off-diag sign
    rot = (
        eye[None] * cos_full[:, None, :]
        + pair[None] * (sign[None, :, None] * sin_full[:, :, None])
    )
    return rot[None].astype(dtype)                         # (1, S, D, D)


if __name__ == "__main__":
    # Shapes implied by the module: n_heads=8, n_kv_heads=1, head_dim=128, seq=128.
    n_heads, n_kv_heads, head_dim, seq = 8, 1, 128, 128

    key = jax.random.PRNGKey(0)
    kq, kk = jax.random.split(key)
    xq = jax.random.normal(kq, (1, n_heads, seq, head_dim), dtype=jnp.float32)
    xk = jax.random.normal(kk, (1, n_kv_heads, seq, head_dim), dtype=jnp.float32)
    rot_mat = _rotation_matrices(seq, head_dim)

    # Debug-mode structural check (review concern): rot_mat must have exactly
    # the interleaved-pair sparsity assumed by the cos/coef extraction.
    d_idx = jnp.arange(head_dim)
    partner = d_idx ^ 1
    recon = jnp.zeros((seq, head_dim, head_dim), jnp.float32)
    recon = recon.at[:, d_idx, d_idx].set(rot_mat[0, :, d_idx, d_idx].T)
    recon = recon.at[:, partner, d_idx].set(rot_mat[0, :, partner, d_idx].T)
    assert jnp.allclose(recon, rot_mat[0], atol=1e-6), "rot_mat is not interleaved-pair rotary"

    # Auto-picked seq_tile here is 64 -> grid of 2 steps (both v7x TCs busy).
    out_q, out_k = tt_llama_rotary(xq, xk, rot_mat)
    jax.block_until_ready((out_q, out_k))

    # Pure-JAX dense-matrix reference: validates both the cos/coef extraction
    # and the elementwise (roll+select) rotation against the x @ rot_mat path.
    ref_q = jnp.einsum("bhsd,bsde->bhse", xq, rot_mat)
    ref_k = jnp.einsum("bhsd,bsde->bhse", xk, rot_mat)
    assert out_q.shape == (1, n_heads, seq, head_dim)
    assert out_k.shape == (1, n_kv_heads, seq, head_dim)
    assert jnp.allclose(out_q, ref_q, atol=1e-4, rtol=1e-4)
    assert jnp.allclose(out_k, ref_k, atol=1e-4, rtol=1e-4)

    print("KERNEL_OK")
</pallas_src>

<mosaic_0001>
module attributes {stable_mosaic.version = 11 : i64} {
  func.func @rotary_kernel(%arg0: i32, %arg1: memref<8x64x128xf32, #tpu.memory_space<vmem>>, %arg2: memref<1x64x128xf32, #tpu.memory_space<vmem>>, %arg3: memref<64x128xf32, #tpu.memory_space<vmem>>, %arg4: memref<64x128xf32, #tpu.memory_space<vmem>>, %arg5: memref<8x64x128xf32, #tpu.memory_space<vmem>>, %arg6: memref<1x64x128xf32, #tpu.memory_space<vmem>>) attributes {dimension_semantics = [#tpu.dimension_semantics<parallel>], iteration_bounds = array<i64: 2>, scalar_prefetch = 0 : i64, scratch_operands = 0 : i64, tpu.core_type = #tpu.core_type<tc>, window_params = [{transform_indices = @transform_0, window_bounds = array<i64: 8, 64, 128>}, {transform_indices = @transform_1, window_bounds = array<i64: 1, 64, 128>}, {transform_indices = @transform_2, window_bounds = array<i64: 64, 128>}, {transform_indices = @transform_3, window_bounds = array<i64: 64, 128>}, {transform_indices = @transform_4, window_bounds = array<i64: 8, 64, 128>}, {transform_indices = @transform_5, window_bounds = array<i64: 1, 64, 128>}]} {
    %c0 = arith.constant 0 : index
    %c0_0 = arith.constant 0 : index
    %0 = vector.load %arg3[%c0, %c0_0] : memref<64x128xf32, #tpu.memory_space<vmem>>, vector<64x128xf32>
    %1 = vector.shape_cast %0 : vector<64x128xf32> to vector<1x64x128xf32>
    %c0_1 = arith.constant 0 : index
    %c0_2 = arith.constant 0 : index
    %2 = vector.load %arg4[%c0_1, %c0_2] : memref<64x128xf32, #tpu.memory_space<vmem>>, vector<64x128xf32>
    %3 = vector.shape_cast %2 : vector<64x128xf32> to vector<1x64x128xf32>
    %4 = tpu.iota {dimensions = array<i32: 2>} : vector<1x64x128xi32>
    %c2_i32 = arith.constant 2 : i32
    %c0_i32 = arith.constant 0 : i32
    %5 = arith.cmpi eq, %c2_i32, %c0_i32 : i32
    %c1_i32 = arith.constant 1 : i32
    %6 = arith.select %5, %c1_i32, %c2_i32 : i32
    %7 = vector.broadcast %6 : i32 to vector<1x64x128xi32>
    %8 = arith.remsi %4, %7 : vector<1x64x128xi32>
    %c0_i32_3 = arith.constant 0 : i32
    %9 = vector.broadcast %c0_i32_3 : i32 to vector<1x64x128xi32>
    %10 = arith.cmpi ne, %8, %9 : vector<1x64x128xi32>
    %c0_i32_4 = arith.constant 0 : i32
    %11 = vector.broadcast %c0_i32_4 : i32 to vector<1x64x128xi32>
    %12 = arith.cmpi slt, %8, %11 : vector<1x64x128xi32>
    %c0_i32_5 = arith.constant 0 : i32
    %13 = arith.cmpi slt, %6, %c0_i32_5 : i32
    %14 = vector.broadcast %13 : i1 to vector<1x64x128xi1>
    %15 = vector.broadcast %14 : vector<1x64x128xi1> to vector<1x64x128xi1>
    %16 = arith.xori %12, %15 : vector<1x64x128xi1>
    %17 = arith.andi %16, %10 : vector<1x64x128xi1>
    %18 = vector.broadcast %6 : i32 to vector<1x64x128xi32>
    %19 = arith.addi %8, %18 : vector<1x64x128xi32>
    %20 = arith.select %17, %19, %8 : vector<1x64x128xi1>, vector<1x64x128xi32>
    %c0_i32_6 = arith.constant 0 : i32
    %21 = vector.broadcast %c0_i32_6 : i32 to vector<1x64x128xi32>
    %22 = arith.cmpi eq, %20, %21 : vector<1x64x128xi32>
    %c0_7 = arith.constant 0 : index
    %c0_8 = arith.constant 0 : index
    %c0_9 = arith.constant 0 : index
    %23 = vector.load %arg1[%c0_7, %c0_8, %c0_9] : memref<8x64x128xf32, #tpu.memory_space<vmem>>, vector<8x64x128xf32>
    %c127_i32 = arith.constant 127 : i32
    %24 = tpu.dynamic_rotate %23 by %c127_i32 dim 2 : vector<8x64x128xf32>, i32 -> vector<8x64x128xf32>
    %c1_i32_10 = arith.constant 1 : i32
    %25 = tpu.dynamic_rotate %23 by %c1_i32_10 dim 2 : vector<8x64x128xf32>, i32 -> vector<8x64x128xf32>
    %26 = vector.shape_cast %22 : vector<1x64x128xi1> to vector<1x64x128xi1>
    %27 = vector.broadcast %26 : vector<1x64x128xi1> to vector<8x64x128xi1>
    %28 = arith.select %27, %24, %25 : vector<8x64x128xi1>, vector<8x64x128xf32>
    %29 = vector.broadcast %1 : vector<1x64x128xf32> to vector<8x64x128xf32>
    %30 = arith.mulf %23, %29 : vector<8x64x128xf32>
    %31 = vector.broadcast %3 : vector<1x64x128xf32> to vector<8x64x128xf32>
    %32 = arith.mulf %28, %31 : vector<8x64x128xf32>
    %33 = arith.addf %30, %32 : vector<8x64x128xf32>
    %c0_11 = arith.constant 0 : index
    %c0_12 = arith.constant 0 : index
    %c0_13 = arith.constant 0 : index
    %34 = vector.load %arg5[%c0_11, %c0_12, %c0_13] : memref<8x64x128xf32, #tpu.memory_space<vmem>>, vector<8x64x128xf32>
    tpu.vector_store %arg5[%c0_11, %c0_12, %c0_13], %33 {strides = array<i32>} : memref<8x64x128xf32, #tpu.memory_space<vmem>>, vector<8x64x128xf32>,
    %c0_14 = arith.constant 0 : index
    %c0_15 = arith.constant 0 : index
    %c0_16 = arith.constant 0 : index
    %35 = vector.load %arg2[%c0_14, %c0_15, %c0_16] : memref<1x64x128xf32, #tpu.memory_space<vmem>>, vector<1x64x128xf32>
    %c127_i32_17 = arith.constant 127 : i32
    %36 = tpu.dynamic_rotate %35 by %c127_i32_17 dim 2 : vector<1x64x128xf32>, i32 -> vector<1x64x128xf32>
    %c1_i32_18 = arith.constant 1 : i32
    %37 = tpu.dynamic_rotate %35 by %c1_i32_18 dim 2 : vector<1x64x128xf32>, i32 -> vector<1x64x128xf32>
    %38 = arith.select %22, %36, %37 : vector<1x64x128xi1>, vector<1x64x128xf32>
    %39 = arith.mulf %35, %1 : vector<1x64x128xf32>
    %40 = arith.mulf %38, %3 : vector<1x64x128xf32>
    %41 = arith.addf %39, %40 : vector<1x64x128xf32>
    %c0_19 = arith.constant 0 : index
    %c0_20 = arith.constant 0 : index
    %c0_21 = arith.constant 0 : index
    %42 = vector.load %arg6[%c0_19, %c0_20, %c0_21] : memref<1x64x128xf32, #tpu.memory_space<vmem>>, vector<1x64x128xf32>
    tpu.vector_store %arg6[%c0_19, %c0_20, %c0_21], %41 {strides = array<i32>} : memref<1x64x128xf32, #tpu.memory_space<vmem>>, vector<1x64x128xf32>,
    return
  }
  func.func @transform_0(%arg0: i32) -> (i32, i32, i32) {
    %c0_i32 = arith.constant 0 : i32
    %c0_i32_0 = arith.constant 0 : i32
    %c0_i32_1 = arith.constant 0 : i32
    return %c0_i32, %arg0, %c0_i32_0 : i32, i32, i32
  }
  func.func @transform_1(%arg0: i32) -> (i32, i32, i32) {
    %c0_i32 = arith.constant 0 : i32
    %c0_i32_0 = arith.constant 0 : i32
    %c0_i32_1 = arith.constant 0 : i32
    return %c0_i32, %arg0, %c0_i32_0 : i32, i32, i32
  }
  func.func @transform_2(%arg0: i32) -> (i32, i32) {
    %c0_i32 = arith.constant 0 : i32
    %c0_i32_0 = arith.constant 0 : i32
    return %arg0, %c0_i32 : i32, i32
  }
  func.func @transform_3(%arg0: i32) -> (i32, i32) {
    %c0_i32 = arith.constant 0 : i32
    %c0_i32_0 = arith.constant 0 : i32
    return %arg0, %c0_i32 : i32, i32
  }
  func.func @transform_4(%arg0: i32) -> (i32, i32, i32) {
    %c0_i32 = arith.constant 0 : i32
    %c0_i32_0 = arith.constant 0 : i32
    %c0_i32_1 = arith.constant 0 : i32
    return %c0_i32, %arg0, %c0_i32_0 : i32, i32, i32
  }
  func.func @transform_5(%arg0: i32) -> (i32, i32, i32) {
    %c0_i32 = arith.constant 0 : i32
    %c0_i32_0 = arith.constant 0 : i32
    %c0_i32_1 = arith.constant 0 : i32
    return %c0_i32, %arg0, %c0_i32_0 : i32, i32, i32
  }
}

</mosaic_0001>

<llo_original>
// kernel: tpu_custom_call.1
$region0: #{tpu_custom_call.1}
  #allocation0 [shape = 'u32[]', space=smem, size = 0x4, offset = 0x4, fixed_abs, tag = 'smem constant byte address 0x4 - core index']
  #allocation1 [shape = 'u32[72,128]{1,0:T(1,128)}', space=vmem, size = 0x9000, scoped, tag = 'internal scratch']
  #allocation13 [shape = 's32[]', space=sflag, size = 0x4, offset = 0, fixed_abs, tag = 'sflag constant byte address 0x0 - dummy sync flag']
  #allocation15 [shape = 's32[]', space=sflag, size = 0x4, offset = 0, fixed_abs, tag = 'sflag constant byte address 0x0 - dummy sync flag']
  %s0 = inlined_call_operand.hbm [shape: f32[8,128,128], index: 0, kind: input, shape index: {}]
  %s1 = inlined_call_operand.hbm [shape: f32[1,128,128], index: 1, kind: input, shape index: {}]
  %s2 = inlined_call_operand.hbm [shape: f32[128,128], index: 2, kind: input, shape index: {}]
  %s3 = inlined_call_operand.hbm [shape: f32[128,128], index: 3, kind: input, shape index: {}]
  %s4 = inlined_call_operand.hbm [shape: f32[8,128,128], index: 4, kind: output, shape index: {0}]
  %s5 = inlined_call_operand.hbm [shape: f32[1,128,128], index: 5, kind: output, shape index: {1}]
  %6 = xla_tuple %s4, %s5
  %s7 = sld [smem:[#allocation0]]
  $region73: #{tpu_custom_call.1} parent=0
    _
  %s9 = ssub.s32 1, %s7
  %s10 = scalar_select 0, %s9, %s7
  $region1: #{tpu_custom_call.1} parent=0
    #allocation2 [shape = 'u8[524288]{0}', space=vmem, size = 0x80000, scoped, tag = 'input window, operand 0']
    #allocation3 [shape = 's32[2]{0}', space=sflag, size = 0x8, scoped, tag = 'scoped memory for tpu_custom_call.1']
    #allocation4 [shape = 's32[2]{0}', space=sflag, size = 0x8, scoped, tag = 'scoped memory for tpu_custom_call.1']
    #allocation5 [shape = 'u8[65536]{0}', space=vmem, size = 0x10000, scoped, tag = 'input window, operand 1']
    #allocation6 [shape = 's32[2]{0}', space=sflag, size = 0x8, scoped, tag = 'scoped memory for tpu_custom_call.1']
    #allocation7 [shape = 'u8[65536]{0}', space=vmem, size = 0x10000, scoped, tag = 'input window, operand 2']
    #allocation8 [shape = 'u8[65536]{0}', space=vmem, size = 0x10000, scoped, tag = 'input window, operand 3']
    #allocation9 [shape = 's32[2]{0}', space=sflag, size = 0x8, scoped, tag = 'scoped memory for tpu_custom_call.1']
    #allocation10 [shape = 'u8[524288]{0}', space=vmem, size = 0x80000, scoped, tag = 'output window, operand 0']
    #allocation11 [shape = 'u8[65536]{0}', space=vmem, size = 0x10000, scoped, tag = 'output window, operand 1']
    #allocation12 [shape = 's32[2]{0}', space=sflag, size = 0x8, scoped, tag = 'scoped memory for tpu_custom_call.1']
    %11 = vsyncpa [#allocation3], 0
    %s12 = scalar_lea.sflag [#allocation3], 1
    %13 = vsyncpa %s12, 0
    %14 = vsyncpa [#allocation6], 0
    %s15 = scalar_lea.sflag [#allocation6], 1
    %16 = vsyncpa %s15, 0
    %17 = vsyncpa [#allocation9], 0
    %s18 = scalar_lea.sflag [#allocation9], 1
    %19 = vsyncpa %s18, 0
    %20 = vsyncpa [#allocation4], 0
    %s21 = scalar_lea.sflag [#allocation4], 1
    %22 = vsyncpa %s21, 0
    %23 = vsyncpa [#allocation12], 0
    %s24 = scalar_lea.sflag [#allocation12], 1
    %25 = vsyncpa %s24, 0
    loop: start=0, step=1, limit=4
    $region2: #{tpu_custom_call.1} parent=1 // loop_pre_header
      _
    $region3: #{tpu_custom_call.1} parent=1 // loop_header
      %s27 = sphi 0, %s31
      %p28 = scmp.ge.s32.totalorder %s27, 4
      %s37 = sphi 0, %s39
      %s40 = sphi 0, %s37
      %s41 = sphi 0, %s40
      %s57 = sphi 0, %s41
      %s63 = sphi 0, %s65
      %s66 = sphi 0, %s63
      %s67 = sphi 0, %s66
      %s83 = sphi 0, %s67
      %s89 = sphi 0, %s91
      %s92 = sphi 0, %s89
      %s93 = sphi 0, %s92
      %s109 = sphi 0, %s93
      %s115 = sphi 0, %s117
      %s118 = sphi 0, %s115
      %s119 = sphi 0, %s118
      %s135 = sphi 0, %s119
      %s141 = sphi 0, %s143
      %s144 = sphi 0, %s141
      %s145 = sphi 0, %s144
      %s161 = sphi 0, %s145
      %s167 = sphi 0, %s169
      %s170 = sphi 0, %s167
      %s171 = sphi 0, %s170
      %s187 = sphi 0, %s171
    $region4: #{tpu_custom_call.1} parent=1 // loop_header_branch
      %30 = sbr.rel (%p28) target = $region8
    $region5: #{tpu_custom_call.1} parent=1 // loop_body
      %s32 = ssub.s32 %s27, 1
      %s33 = ssub.s32 %s27, 2
      %s34 = sadd.s32 %s27, 1
      %s35 = ssub.s32 %s27, %s34
      %p36 = scmp.eq.s32.totalorder %s35, 0
      %s38 = sadd.s32 %s37, 1
      %s39 = scalar_select %p36, %s37, %s38
      %p42 = pneg %p36
      %p43 = scmp.eq.s32.totalorder %s27, 1
      %p44 = por %p42, %p43
      %p45 = scmp.ne.s32.totalorder %s37, %s40
      %p46 = scmp.eq.s32.totalorder %s27, 0
      %p47 = por %p45, %p46
      %p48 = scmp.ne.s32.totalorder %s37, %s40
      %p49 = scmp.eq.s32.totalorder %s32, 1
      %p50 = por %p48, %p49
      %p51 = scmp.ne.s32.totalorder %s40, %s41
      %p52 = scmp.eq.s32.totalorder %s32, 0
      %p53 = por %p51, %p52
      %p54 = scmp.ne.s32.totalorder %s40, %s41
      %p55 = scmp.eq.s32.totalorder %s33, 1
      %p56 = por %p54, %p55
      %p58 = scmp.ne.s32.totalorder %s41, %s57
      %p59 = scmp.eq.s32.totalorder %s33, 0
      %p60 = por %p58, %p59
      %s61 = ssub.s32 %s27, %s34
      %p62 = scmp.eq.s32.totalorder %s61, 0
      %s64 = sadd.s32 %s63, 1
      %s65 = scalar_select %p62, %s63, %s64
      %p68 = pneg %p62
      %p69 = scmp.eq.s32.totalorder %s27, 1
      %p70 = por %p68, %p69
      %p71 = scmp.ne.s32.totalorder %s63, %s66
      %p72 = scmp.eq.s32.totalorder %s27, 0
      %p73 = por %p71, %p72
      %p74 = scmp.ne.s32.totalorder %s63, %s66
      %p75 = scmp.eq.s32.totalorder %s32, 1
      %p76 = por %p74, %p75
      %p77 = scmp.ne.s32.totalorder %s66, %s67
      %p78 = scmp.eq.s32.totalorder %s32, 0
      %p79 = por %p77, %p78
      %p80 = scmp.ne.s32.totalorder %s66, %s67
      %p81 = scmp.eq.s32.totalorder %s33, 1
      %p82 = por %p80, %p81
      %p84 = scmp.ne.s32.totalorder %s67, %s83
      %p85 = scmp.eq.s32.totalorder %s33, 0
      %p86 = por %p84, %p85
      %s87 = ssub.s32 %s27, %s34
      %p88 = scmp.eq.s32.totalorder %s87, 0
      %s90 = sadd.s32 %s89, 1
      %s91 = scalar_select %p88, %s89, %s90
      %p94 = pneg %p88
      %p95 = scmp.eq.s32.totalorder %s27, 1
      %p96 = por %p94, %p95
      %p97 = scmp.ne.s32.totalorder %s89, %s92
      %p98 = scmp.eq.s32.totalorder %s27, 0
      %p99 = por %p97, %p98
      %p100 = scmp.ne.s32.totalorder %s89, %s92
      %p101 = scmp.eq.s32.totalorder %s32, 1
      %p102 = por %p100, %p101
      %p103 = scmp.ne.s32.totalorder %s92, %s93
      %p104 = scmp.eq.s32.totalorder %s32, 0
      %p105 = por %p103, %p104
      %p106 = scmp.ne.s32.totalorder %s92, %s93
      %p107 = scmp.eq.s32.totalorder %s33, 1
      %p108 = por %p106, %p107
      %p110 = scmp.ne.s32.totalorder %s93, %s109
      %p111 = scmp.eq.s32.totalorder %s33, 0
      %p112 = por %p110, %p111
      %s113 = ssub.s32 %s27, %s34
      %p114 = scmp.eq.s32.totalorder %s113, 0
      %s116 = sadd.s32 %s115, 1
      %s117 = scalar_select %p114, %s115, %s116
      %p120 = pneg %p114
      %p121 = scmp.eq.s32.totalorder %s27, 1
      %p122 = por %p120, %p121
      %p123 = scmp.ne.s32.totalorder %s115, %s118
      %p124 = scmp.eq.s32.totalorder %s27, 0
      %p125 = por %p123, %p124
      %p126 = scmp.ne.s32.totalorder %s115, %s118
      %p127 = scmp.eq.s32.totalorder %s32, 1
      %p128 = por %p126, %p127
      %p129 = scmp.ne.s32.totalorder %s118, %s119
      %p130 = scmp.eq.s32.totalorder %s32, 0
      %p131 = por %p129, %p130
      %p132 = scmp.ne.s32.totalorder %s118, %s119
      %p133 = scmp.eq.s32.totalorder %s33, 1
      %p134 = por %p132, %p133
      %p136 = scmp.ne.s32.totalorder %s119, %s135
      %p137 = scmp.eq.s32.totalorder %s33, 0
      %p138 = por %p136, %p137
      %s139 = ssub.s32 %s27, %s34
      %p140 = scmp.eq.s32.totalorder %s139, 0
      %s142 = sadd.s32 %s141, 1
      %s143 = scalar_select %p140, %s141, %s142
      %p146 = pneg %p140
      %p147 = scmp.eq.s32.totalorder %s27, 1
      %p148 = por %p146, %p147
      %p149 = scmp.ne.s32.totalorder %s141, %s144
      %p150 = scmp.eq.s32.totalorder %s27, 0
      %p151 = por %p149, %p150
      %p152 = scmp.ne.s32.totalorder %s141, %s144
      %p153 = scmp.eq.s32.totalorder %s32, 1
      %p154 = por %p152, %p153
      %p155 = scmp.ne.s32.totalorder %s144, %s145
      %p156 = scmp.eq.s32.totalorder %s32, 0
      %p157 = por %p155, %p156
      %p158 = scmp.ne.s32.totalorder %s144, %s145
      %p159 = scmp.eq.s32.totalorder %s33, 1
      %p160 = por %p158, %p159
      %p162 = scmp.ne.s32.totalorder %s145, %s161
      %p163 = scmp.eq.s32.totalorder %s33, 0
      %p164 = por %p162, %p163
      %s165 = ssub.s32 %s27, %s34
      %p166 = scmp.eq.s32.totalorder %s165, 0
      %s168 = sadd.s32 %s167, 1
      %s169 = scalar_select %p166, %s167, %s168
      %p172 = pneg %p166
      %p173 = scmp.eq.s32.totalorder %s27, 1
      %p174 = por %p172, %p173
      %p175 = scmp.ne.s32.totalorder %s167, %s170
      %p176 = scmp.eq.s32.totalorder %s27, 0
      %p177 = por %p175, %p176
      %p178 = scmp.ne.s32.totalorder %s167, %s170
      %p179 = scmp.eq.s32.totalorder %s32, 1
      %p180 = por %p178, %p179
      %p181 = scmp.ne.s32.totalorder %s170, %s171
      %p182 = scmp.eq.s32.totalorder %s32, 0
      %p183 = por %p181, %p182
      %p184 = scmp.ne.s32.totalorder %s170, %s171
      %p185 = scmp.eq.s32.totalorder %s33, 1
      %p186 = por %p184, %p185
      %p188 = scmp.ne.s32.totalorder %s171, %s187
      %p189 = scmp.eq.s32.totalorder %s33, 0
      %p190 = por %p188, %p189
      %p191 = scmp.le.s32.totalorder 1, %s27
      %p192 = scmp.lt.s32.totalorder %s27, 3
      %p193 = pnand %p191, %p192
      %p194 = pneg %p193
      // Predicated region
      $region9: #{tpu_custom_call.1} parent=5 // pred_check
        _
      $region10: #{tpu_custom_call.1} parent=5 // pred_check_branch
        %196 = sbr.rel (%p193) target = $region12
      $region11: #{tpu_custom_call.1} parent=5 // pred_region
        %s197 = ssub.s32 %s27, 1
      $region12: #{tpu_custom_call.1} parent=5 // pred_fallthru
        _
      %p198 = scmp.lt.s32.totalorder %s27, 2
      // Predicated region
      $region13: #{tpu_custom_call.1} parent=5 // pred_check
        %p199 = pneg %p198
      $region14: #{tpu_custom_call.1} parent=5 // pred_check_branch
        %201 = sbr.rel (%p199) target = $region16
      $region15: #{tpu_custom_call.1} parent=5 // pred_region
        // Predicated region
        $region17: #{tpu_custom_call.1} parent=15 // pred_check
          %p202 = pneg %p47
        $region18: #{tpu_custom_call.1} parent=15 // pred_check_branch
          %204 = sbr.rel (%p202) target = $region20
        $region19: #{tpu_custom_call.1} parent=15 // pred_region
          #allocation14 [shape = 'u32[6]{0}', space=smem, size = 0x18, scoped, tag = 'DMA stride descriptor']
          %s205 = sand.u32 %s37, 1
          %s206 = scalar_lea.sflag [#allocation3], %s205
          %s207 = sand.u32 %s37, 1
          %s208 = smul.addr %s207, 512
          %s209 = scalar_lea.vmem [#allocation2], %s208
          %s210 = smul.u32 8, %s27
          %212 = vsyncadd %s206, 0
          %s213 = smul.addr %s210, 8
          %s214 = scalar_lea.hbm %s0, %s213
          %s216 = sshll.u32 1, 14
          %s217 = sxor.u32 4294967295, %s216
          %s219 = sld [smem:[#allocation0]]
          %s220 = sadd.s32 2, %s219
          %s222 = sshll.u32 7, 26
          %s223 = sxor.u32 4294967295, %s222
          %s224 = sand.u32 0, %s223
          %s225 = sshll.u32 %s220, 26
          %s226 = sor.u32 %s224, %s225
          %s227 = sshll.u32 %s214, 4
          %s228 = int_to_ptr.hbm [resolvable:$true] %s227
          %s229 = sshll.u32 %s209, 4
          %s230 = int_to_ptr.vmem [resolvable:$true] %s229
          %236 = sst [smem:[#allocation14]] 2048
          %s237 = scalar_lea.smem [#allocation14], 1
          %238 = sst [smem:[%s237]] 1024
          %s239 = scalar_lea.smem [#allocation14], 2
          %240 = sst [smem:[%s239]] 8
          %s241 = scalar_lea.smem [#allocation14], 3
          %242 = sst [smem:[%s241]] 128
          %s243 = scalar_lea.smem [#allocation14], 4
          %244 = sst [smem:[%s243]] 128
          %s245 = scalar_lea.smem [#allocation14], 5
          %246 = sst [smem:[%s245]] 8
          %248 = dma.general %s228, 8192, %s230, %s206, [#allocation13], [#allocation14], %s226, 0
        $region20: #{tpu_custom_call.1} parent=15 // pred_fallthru
          _
        // Predicated region
        $region21: #{tpu_custom_call.1} parent=15 // pred_check
          %p249 = pneg %p73
        $region22: #{tpu_custom_call.1} parent=15 // pred_check_branch
          %251 = sbr.rel (%p249) target = $region24
        $region23: #{tpu_custom_call.1} parent=15 // pred_region
          %s252 = sand.u32 %s27, 1
          %s253 = scalar_lea.sflag [#allocation6], %s252
          %s254 = sand.u32 %s63, 1
          %s255 = smul.addr %s254, 64
          %s256 = scalar_lea.vmem [#allocation5], %s255
          %s257 = smul.u32 8, %s27
          %259 = vsyncadd %s253, 0
          %s260 = smul.addr %s257, 8
          %s261 = scalar_lea.hbm %s1, %s260
          %s262 = sshll.u32 %s261, 4
          %s263 = int_to_ptr.hbm [resolvable:$true] %s262
          %s264 = sshll.u32 %s256, 4
          %s265 = int_to_ptr.vmem [resolvable:$true] %s264
          %270 = dma.hbm_to_vmem [thread:$0]  %s263, 1024, %s265, %s253, 128, 128, 8
        $region24: #{tpu_custom_call.1} parent=15 // pred_fallthru
          _
        // Predicated region
        $region25: #{tpu_custom_call.1} parent=15 // pred_check
          %p271 = pneg %p99
        $region26: #{tpu_custom_call.1} parent=15 // pred_check_branch
          %273 = sbr.rel (%p271) target = $region28
        $region27: #{tpu_custom_call.1} parent=15 // pred_region
          %s274 = sand.u32 %s27, 1
          %s275 = scalar_lea.sflag [#allocation6], %s274
          %s276 = sand.u32 %s89, 1
          %s277 = smul.addr %s276, 64
          %s278 = scalar_lea.vmem [#allocation7], %s277
          %s279 = smul.u32 8, %s27
          %281 = vsyncadd %s275, 0
          %s282 = smul.addr %s279, 8
          %s283 = scalar_lea.hbm %s2, %s282
          %s284 = sshll.u32 %s283, 4
          %s285 = int_to_ptr.hbm [resolvable:$true] %s284
          %s286 = sshll.u32 %s278, 4
          %s287 = int_to_ptr.vmem [resolvable:$true] %s286
          %292 = dma.hbm_to_vmem [thread:$0]  %s285, 1024, %s287, %s275, 128, 128, 8
        $region28: #{tpu_custom_call.1} parent=15 // pred_fallthru
          _
        // Predicated region
        $region29: #{tpu_custom_call.1} parent=15 // pred_check
          %p293 = pneg %p125
        $region30: #{tpu_custom_call.1} parent=15 // pred_check_branch
          %295 = sbr.rel (%p293) target = $region32
        $region31: #{tpu_custom_call.1} parent=15 // pred_region
          %s296 = sand.u32 %s115, 1
          %s297 = scalar_lea.sflag [#allocation9], %s296
          %s298 = sand.u32 %s115, 1
          %s299 = smul.addr %s298, 64
          %s300 = scalar_lea.vmem [#allocation8], %s299
          %s301 = smul.u32 8, %s27
          %303 = vsyncadd %s297, 0
          %s304 = smul.addr %s301, 8
          %s305 = scalar_lea.hbm %s3, %s304
          %s306 = sshll.u32 %s305, 4
          %s307 = int_to_ptr.hbm [resolvable:$true] %s306
          %s308 = sshll.u32 %s300, 4
          %s309 = int_to_ptr.vmem [resolvable:$true] %s308
          %314 = dma.hbm_to_vmem [thread:$0]  %s307, 1024, %s309, %s297, 128, 128, 8
        $region32: #{tpu_custom_call.1} parent=15 // pred_fallthru
          _
      $region16: #{tpu_custom_call.1} parent=5 // pred_fallthru
        _
      %p315 = scmp.le.s32.totalorder 1, %s27
      %p316 = scmp.lt.s32.totalorder %s27, 3
      %p317 = pnand %p315, %p316
      %p318 = pneg %p317
      // Predicated region
      $region33: #{tpu_custom_call.1} parent=5 // pred_check
        _
      $region34: #{tpu_custom_call.1} parent=5 // pred_check_branch
        %320 = sbr.rel (%p317) target = $region36
      $region35: #{tpu_custom_call.1} parent=5 // pred_region
        %s321 = ssub.s32 %s27, 1
        %s322 = sand.u32 %s40, 1
        %s323 = scalar_lea.sflag [#allocation3], %s322
        %s324 = sand.u32 %s40, 1
        %s325 = smul.addr %s324, 512
        %s326 = scalar_lea.vmem [#allocation2], %s325
        // Predicated region
        $region37: #{tpu_custom_call.1} parent=35 // pred_check
          %p327 = pneg %p53
        $region38: #{tpu_custom_call.1} parent=35 // pred_check_branch
          %329 = sbr.rel (%p327) target = $region40
        $region39: #{tpu_custom_call.1} parent=35 // pred_region
          %331 = dma.done %s323, 8192
        $region40: #{tpu_custom_call.1} parent=35 // pred_fallthru
          _
        %s332 = sand.u32 %s32, 1
        %s333 = scalar_lea.sflag [#allocation6], %s332
        %s334 = sand.u32 %s66, 1
        %s335 = smul.addr %s334, 64
        %s336 = scalar_lea.vmem [#allocation5], %s335
        // Predicated region
        $region41: #{tpu_custom_call.1} parent=35 // pred_check
          %p337 = pneg %p79
        $region42: #{tpu_custom_call.1} parent=35 // pred_check_branch
          %339 = sbr.rel (%p337) target = $region44
        $region43: #{tpu_custom_call.1} parent=35 // pred_region
          %341 = dma.done %s333, 1024
        $region44: #{tpu_custom_call.1} parent=35 // pred_fallthru
          _
        %s342 = sand.u32 %s32, 1
        %s343 = scalar_lea.sflag [#allocation6], %s342
        %s344 = sand.u32 %s92, 1
        %s345 = smul.addr %s344, 64
        %s346 = scalar_lea.vmem [#allocation7], %s345
        // Predicated region
        $region45: #{tpu_custom_call.1} parent=35 // pred_check
          %p347 = pneg %p105
        $region46: #{tpu_custom_call.1} parent=35 // pred_check_branch
          %349 = sbr.rel (%p347) target = $region48
        $region47: #{tpu_custom_call.1} parent=35 // pred_region
          %351 = dma.done %s343, 1024
        $region48: #{tpu_custom_call.1} parent=35 // pred_fallthru
          _
        %s352 = sand.u32 %s118, 1
        %s353 = scalar_lea.sflag [#allocation9], %s352
        %s354 = sand.u32 %s118, 1
        %s355 = smul.addr %s354, 64
        %s356 = scalar_lea.vmem [#allocation8], %s355
        // Predicated region
        $region49: #{tpu_custom_call.1} parent=35 // pred_check
          %p357 = pneg %p131
        $region50: #{tpu_custom_call.1} parent=35 // pred_check_branch
          %359 = sbr.rel (%p357) target = $region52
        $region51: #{tpu_custom_call.1} parent=35 // pred_region
          %361 = dma.done %s353, 1024
        $region52: #{tpu_custom_call.1} parent=35 // pred_fallthru
          _
        %s362 = sand.u32 %s40, 1
        %s363 = scalar_lea.sflag [#allocation3], %s362
        %s364 = sand.u32 %s40, 1
        %s365 = smul.addr %s364, 512
        %s366 = scalar_lea.vmem [#allocation2], %s365
        %p367 = pneg %p53
        %p368 = pneg %p50
        %s369 = sand.u32 %s32, 1
        %s370 = scalar_lea.sflag [#allocation6], %s369
        %s371 = sand.u32 %s66, 1
        %s372 = smul.addr %s371, 64
        %s373 = scalar_lea.vmem [#allocation5], %s372
        %p374 = pneg %p79
        %p375 = pneg %p76
        %s376 = sand.u32 %s32, 1
        %s377 = scalar_lea.sflag [#allocation6], %s376
        %s378 = sand.u32 %s92, 1
        %s379 = smul.addr %s378, 64
        %s380 = scalar_lea.vmem [#allocation7], %s379
        %p381 = pneg %p105
        %p382 = pneg %p102
        %s383 = sand.u32 %s118, 1
        %s384 = scalar_lea.sflag [#allocation9], %s383
        %s385 = sand.u32 %s118, 1
        %s386 = smul.addr %s385, 64
        %s387 = scalar_lea.vmem [#allocation8], %s386
        %p388 = pneg %p131
        %p389 = pneg %p128
        %p390 = pneg %p157
        %p391 = pneg %p154
        %s392 = sand.u32 %s144, 1
        %s393 = scalar_lea.sflag [#allocation4], %s392
        %s394 = sand.u32 %s144, 1
        %s395 = smul.addr %s394, 512
        %s396 = scalar_lea.vmem [#allocation10], %s395
        %p397 = pneg %p183
        %p398 = pneg %p180
        %s399 = sand.u32 %s170, 1
        %s400 = scalar_lea.sflag [#allocation12], %s399
        %s401 = sand.u32 %s170, 1
        %s402 = smul.addr %s401, 64
        %s403 = scalar_lea.vmem [#allocation11], %s402
        %s404 = smul.u32 8, %s32
        %s405 = smul.u32 8, %s32
        %s406 = smul.u32 8, %s32
        %s407 = smul.u32 8, %s32
        %s408 = smul.u32 8, %s32
        %s409 = smul.u32 8, %s32
        %v410 = vld [vmem:[%s346] sm:$0xff]
        %v411 = vld [vmem:[%s346 + $0x8] sm:$0xff]
        %v412 = vld [vmem:[%s346 + $0x10] sm:$0xff]
        %v413 = vld [vmem:[%s346 + $0x18] sm:$0xff]
        %v414 = vld [vmem:[%s346 + $0x20] sm:$0xff]
        %v415 = vld [vmem:[%s346 + $0x28] sm:$0xff]
        %v416 = vld [vmem:[%s346 + $0x30] sm:$0xff]
        %v417 = vld [vmem:[%s346 + $0x38] sm:$0xff]
        %v418 = vld [vmem:[%s356] sm:$0xff]
        %v419 = vld [vmem:[%s356 + $0x8] sm:$0xff]
        %v420 = vld [vmem:[%s356 + $0x10] sm:$0xff]
        %v421 = vld [vmem:[%s356 + $0x18] sm:$0xff]
        %v422 = vld [vmem:[%s356 + $0x20] sm:$0xff]
        %v423 = vld [vmem:[%s356 + $0x28] sm:$0xff]
        %v424 = vld [vmem:[%s356 + $0x30] sm:$0xff]
        %v425 = vld [vmem:[%s356 + $0x38] sm:$0xff]
        %v426 = vlaneseq
        %v427 = vand.u32 %v426, 127
        %vm428 = vcmp.lt.s32.totalorder %v427, 0
        %v429 = vsub.s32 0, %v427
        %v430 = vsel %vm428, %v429, %v427
        %v431 = vshrl.u32 %v430, 1
        %v432 = vand.u32 %v430, 1
        %v433 = vsub.s32 0, %v432
        %v434 = vsel %vm428, %v433, %v432
        %vm435 = vcmp.ne.s32.totalorder %v434, 0
        %vm436 = vcmp.lt.s32.totalorder %v434, 0
        %vm437 = vmand %vm436, %vm435
        %v438 = vadd.s32 %v434, 2
        %v439 = vsel %vm437, %v438, %v434
        %vm440 = vcmp.eq.s32.totalorder %v439, 0
        %v441 = vld [vmem:[%s326] sm:$0xff]
        %v442 = vld [vmem:[%s326 + $0x8] sm:$0xff]
        %v443 = vld [vmem:[%s326 + $0x10] sm:$0xff]
        %v444 = vld [vmem:[%s326 + $0x18] sm:$0xff]
        %v445 = vld [vmem:[%s326 + $0x20] sm:$0xff]
        %v446 = vld [vmem:[%s326 + $0x28] sm:$0xff]
        %v447 = vld [vmem:[%s326 + $0x30] sm:$0xff]
        %v448 = vld [vmem:[%s326 + $0x38] sm:$0xff]
        %v449 = vld [vmem:[%s326 + $0x40] sm:$0xff]
        %v450 = vld [vmem:[%s326 + $0x48] sm:$0xff]
        %v451 = vld [vmem:[%s326 + $0x50] sm:$0xff]
        %v452 = vld [vmem:[%s326 + $0x58] sm:$0xff]
        %v453 = vld [vmem:[%s326 + $0x60] sm:$0xff]
        %v454 = vld [vmem:[%s326 + $0x68] sm:$0xff]
        %v455 = vld [vmem:[%s326 + $0x70] sm:$0xff]
        %v456 = vld [vmem:[%s326 + $0x78] sm:$0xff]
        %v457 = vld [vmem:[%s326 + $0x80] sm:$0xff]
        %v458 = vld [vmem:[%s326 + $0x88] sm:$0xff]
        %v459 = vld [vmem:[%s326 + $0x90] sm:$0xff]
        %v460 = vld [vmem:[%s326 + $0x98] sm:$0xff]
        %v461 = vld [vmem:[%s326 + $0xa0] sm:$0xff]
        %v462 = vld [vmem:[%s326 + $0xa8] sm:$0xff]
        %v463 = vld [vmem:[%s326 + $0xb0] sm:$0xff]
        %v464 = vld [vmem:[%s326 + $0xb8] sm:$0xff]
        %v465 = vld [vmem:[%s326 + $0xc0] sm:$0xff]
        %v466 = vld [vmem:[%s326 + $0xc8] sm:$0xff]
        %v467 = vld [vmem:[%s326 + $0xd0] sm:$0xff]
        %v468 = vld [vmem:[%s326 + $0xd8] sm:$0xff]
        %v469 = vld [vmem:[%s326 + $0xe0] sm:$0xff]
        %v470 = vld [vmem:[%s326 + $0xe8] sm:$0xff]
        %v471 = vld [vmem:[%s326 + $0xf0] sm:$0xff]
        %v472 = vld [vmem:[%s326 + $0xf8] sm:$0xff]
        %v473 = vld [vmem:[%s326 + $0x100] sm:$0xff]
        %v474 = vld [vmem:[%s326 + $0x108] sm:$0xff]
        %v475 = vld [vmem:[%s326 + $0x110] sm:$0xff]
        %v476 = vld [vmem:[%s326 + $0x118] sm:$0xff]
        %v477 = vld [vmem:[%s326 + $0x120] sm:$0xff]
        %v478 = vld [vmem:[%s326 + $0x128] sm:$0xff]
        %v479 = vld [vmem:[%s326 + $0x130] sm:$0xff]
        %v480 = vld [vmem:[%s326 + $0x138] sm:$0xff]
        %v481 = vld [vmem:[%s326 + $0x140] sm:$0xff]
        %v482 = vld [vmem:[%s326 + $0x148] sm:$0xff]
        %v483 = vld [vmem:[%s326 + $0x150] sm:$0xff]
        %v484 = vld [vmem:[%s326 + $0x158] sm:$0xff]
        %v485 = vld [vmem:[%s326 + $0x160] sm:$0xff]
        %v486 = vld [vmem:[%s326 + $0x168] sm:$0xff]
        %v487 = vld [vmem:[%s326 + $0x170] sm:$0xff]
        %v488 = vld [vmem:[%s326 + $0x178] sm:$0xff]
        %v489 = vld [vmem:[%s326 + $0x180] sm:$0xff]
        %v490 = vld [vmem:[%s326 + $0x188] sm:$0xff]
        %v491 = vld [vmem:[%s326 + $0x190] sm:$0xff]
        %v492 = vld [vmem:[%s326 + $0x198] sm:$0xff]
        %v493 = vld [vmem:[%s326 + $0x1a0] sm:$0xff]
        %v494 = vld [vmem:[%s326 + $0x1a8] sm:$0xff]
        %v495 = vld [vmem:[%s326 + $0x1b0] sm:$0xff]
        %v496 = vld [vmem:[%s326 + $0x1b8] sm:$0xff]
        %v497 = vld [vmem:[%s326 + $0x1c0] sm:$0xff]
        %v498 = vld [vmem:[%s326 + $0x1c8] sm:$0xff]
        %v499 = vld [vmem:[%s326 + $0x1d0] sm:$0xff]
        %v500 = vld [vmem:[%s326 + $0x1d8] sm:$0xff]
        %v501 = vld [vmem:[%s326 + $0x1e0] sm:$0xff]
        %v502 = vld [vmem:[%s326 + $0x1e8] sm:$0xff]
        %v503 = vld [vmem:[%s326 + $0x1f0] sm:$0xff]
        %v504 = vld [vmem:[%s326 + $0x1f8] sm:$0xff]
        %505 = vrot.lane.b32.xlu0 %v441, 127
        %v506 = vpop.permute.xlu0 %505
        %507 = vrot.lane.b32.xlu0 %v442, 127
        %v508 = vpop.permute.xlu0 %507
        %509 = vrot.lane.b32.xlu0 %v443, 127
        %v510 = vpop.permute.xlu0 %509
        %511 = vrot.lane.b32.xlu0 %v444, 127
        %v512 = vpop.permute.xlu0 %511
        %513 = vrot.lane.b32.xlu0 %v445, 127
        %v514 = vpop.permute.xlu0 %513
        %515 = vrot.lane.b32.xlu0 %v446, 127
        %v516 = vpop.permute.xlu0 %515
        %517 = vrot.lane.b32.xlu0 %v447, 127
        %v518 = vpop.permute.xlu0 %517
        %519 = vrot.lane.b32.xlu0 %v448, 127
        %v520 = vpop.permute.xlu0 %519
        %521 = vrot.lane.b32.xlu0 %v449, 127
        %v522 = vpop.permute.xlu0 %521
        %523 = vrot.lane.b32.xlu0 %v450, 127
        %v524 = vpop.permute.xlu0 %523
        %525 = vrot.lane.b32.xlu0 %v451, 127
        %v526 = vpop.permute.xlu0 %525
        %527 = vrot.lane.b32.xlu0 %v452, 127
        %v528 = vpop.permute.xlu0 %527
        %529 = vrot.lane.b32.xlu0 %v453, 127
        %v530 = vpop.permute.xlu0 %529
        %531 = vrot.lane.b32.xlu0 %v454, 127
        %v532 = vpop.permute.xlu0 %531
        %533 = vrot.lane.b32.xlu0 %v455, 127
        %v534 = vpop.permute.xlu0 %533
        %535 = vrot.lane.b32.xlu0 %v456, 127
        %v536 = vpop.permute.xlu0 %535
        %537 = vrot.lane.b32.xlu0 %v457, 127
        %v538 = vpop.permute.xlu0 %537
        %539 = vrot.lane.b32.xlu0 %v458, 127
        %v540 = vpop.permute.xlu0 %539
        %541 = vrot.lane.b32.xlu0 %v459, 127
        %v542 = vpop.permute.xlu0 %541
        %543 = vrot.lane.b32.xlu0 %v460, 127
        %v544 = vpop.permute.xlu0 %543
        %545 = vrot.lane.b32.xlu0 %v461, 127
        %v546 = vpop.permute.xlu0 %545
        %547 = vrot.lane.b32.xlu0 %v462, 127
        %v548 = vpop.permute.xlu0 %547
        %549 = vrot.lane.b32.xlu0 %v463, 127
        %v550 = vpop.permute.xlu0 %549
        %551 = vrot.lane.b32.xlu0 %v464, 127
        %v552 = vpop.permute.xlu0 %551
        %553 = vrot.lane.b32.xlu0 %v465, 127
        %v554 = vpop.permute.xlu0 %553
        %555 = vrot.lane.b32.xlu0 %v466, 127
        %v556 = vpop.permute.xlu0 %555
        %557 = vrot.lane.b32.xlu0 %v467, 127
        %v558 = vpop.permute.xlu0 %557
        %559 = vrot.lane.b32.xlu0 %v468, 127
        %v560 = vpop.permute.xlu0 %559
        %561 = vrot.lane.b32.xlu0 %v469, 127
        %v562 = vpop.permute.xlu0 %561
        %563 = vrot.lane.b32.xlu0 %v470, 127
        %v564 = vpop.permute.xlu0 %563
        %565 = vrot.lane.b32.xlu0 %v471, 127
        %v566 = vpop.permute.xlu0 %565
        %567 = vrot.lane.b32.xlu0 %v472, 127
        %v568 = vpop.permute.xlu0 %567
        %569 = vrot.lane.b32.xlu0 %v473, 127
        %v570 = vpop.permute.xlu0 %569
        %571 = vrot.lane.b32.xlu0 %v474, 127
        %v572 = vpop.permute.xlu0 %571
        %573 = vrot.lane.b32.xlu0 %v475, 127
        %v574 = vpop.permute.xlu0 %573
        %575 = vrot.lane.b32.xlu0 %v476, 127
        %v576 = vpop.permute.xlu0 %575
        %577 = vrot.lane.b32.xlu0 %v477, 127
        %v578 = vpop.permute.xlu0 %577
        %579 = vrot.lane.b32.xlu0 %v478, 127
        %v580 = vpop.permute.xlu0 %579
        %581 = vrot.lane.b32.xlu0 %v479, 127
        %v582 = vpop.permute.xlu0 %581
        %583 = vrot.lane.b32.xlu0 %v480, 127
        %v584 = vpop.permute.xlu0 %583
        %585 = vrot.lane.b32.xlu0 %v481, 127
        %v586 = vpop.permute.xlu0 %585
        %587 = vrot.lane.b32.xlu0 %v482, 127
        %v588 = vpop.permute.xlu0 %587
        %589 = vrot.lane.b32.xlu0 %v483, 127
        %v590 = vpop.permute.xlu0 %589
        %591 = vrot.lane.b32.xlu0 %v484, 127
        %v592 = vpop.permute.xlu0 %591
        %593 = vrot.lane.b32.xlu0 %v485, 127
        %v594 = vpop.permute.xlu0 %593
        %595 = vrot.lane.b32.xlu0 %v486, 127
        %v596 = vpop.permute.xlu0 %595
        %597 = vrot.lane.b32.xlu0 %v487, 127
        %v598 = vpop.permute.xlu0 %597
        %599 = vrot.lane.b32.xlu0 %v488, 127
        %v600 = vpop.permute.xlu0 %599
        %601 = vrot.lane.b32.xlu0 %v489, 127
        %v602 = vpop.permute.xlu0 %601
        %603 = vrot.lane.b32.xlu0 %v490, 127
        %v604 = vpop.permute.xlu0 %603
        %605 = vrot.lane.b32.xlu0 %v491, 127
        %v606 = vpop.permute.xlu0 %605
        %607 = vrot.lane.b32.xlu0 %v492, 127
        %v608 = vpop.permute.xlu0 %607
        %609 = vrot.lane.b32.xlu0 %v493, 127
        %v610 = vpop.permute.xlu0 %609
        %611 = vrot.lane.b32.xlu0 %v494, 127
        %v612 = vpop.permute.xlu0 %611
        %613 = vrot.lane.b32.xlu0 %v495, 127
        %v614 = vpop.permute.xlu0 %613
        %615 = vrot.lane.b32.xlu0 %v496, 127
        %v616 = vpop.permute.xlu0 %615
        %617 = vrot.lane.b32.xlu0 %v497, 127
        %v618 = vpop.permute.xlu0 %617
        %619 = vrot.lane.b32.xlu0 %v498, 127
        %v620 = vpop.permute.xlu0 %619
        %621 = vrot.lane.b32.xlu0 %v499, 127
        %v622 = vpop.permute.xlu0 %621
        %623 = vrot.lane.b32.xlu0 %v500, 127
        %v624 = vpop.permute.xlu0 %623
        %625 = vrot.lane.b32.xlu0 %v501, 127
        %v626 = vpop.permute.xlu0 %625
        %627 = vrot.lane.b32.xlu0 %v502, 127
        %v628 = vpop.permute.xlu0 %627
        %629 = vrot.lane.b32.xlu0 %v503, 127
        %v630 = vpop.permute.xlu0 %629
        %631 = vrot.lane.b32.xlu0 %v504, 127
        %v632 = vpop.permute.xlu0 %631
        %633 = vrot.lane.b32.xlu0 %v441, 1
        %v634 = vpop.permute.xlu0 %633
        %635 = vrot.lane.b32.xlu0 %v442, 1
        %v636 = vpop.permute.xlu0 %635
        %637 = vrot.lane.b32.xlu0 %v443, 1
        %v638 = vpop.permute.xlu0 %637
        %639 = vrot.lane.b32.xlu0 %v444, 1
        %v640 = vpop.permute.xlu0 %639
        %641 = vrot.lane.b32.xlu0 %v445, 1
        %v642 = vpop.permute.xlu0 %641
        %643 = vrot.lane.b32.xlu0 %v446, 1
        %v644 = vpop.permute.xlu0 %643
        %645 = vrot.lane.b32.xlu0 %v447, 1
        %v646 = vpop.permute.xlu0 %645
        %647 = vrot.lane.b32.xlu0 %v448, 1
        %v648 = vpop.permute.xlu0 %647
        %649 = vrot.lane.b32.xlu0 %v449, 1
        %v650 = vpop.permute.xlu0 %649
        %651 = vrot.lane.b32.xlu0 %v450, 1
        %v652 = vpop.permute.xlu0 %651
        %653 = vrot.lane.b32.xlu0 %v451, 1
        %v654 = vpop.permute.xlu0 %653
        %655 = vrot.lane.b32.xlu0 %v452, 1
        %v656 = vpop.permute.xlu0 %655
        %657 = vrot.lane.b32.xlu0 %v453, 1
        %v658 = vpop.permute.xlu0 %657
        %659 = vrot.lane.b32.xlu0 %v454, 1
        %v660 = vpop.permute.xlu0 %659
        %661 = vrot.lane.b32.xlu0 %v455, 1
        %v662 = vpop.permute.xlu0 %661
        %663 = vrot.lane.b32.xlu0 %v456, 1
        %v664 = vpop.permute.xlu0 %663
        %665 = vrot.lane.b32.xlu0 %v457, 1
        %v666 = vpop.permute.xlu0 %665
        %667 = vrot.lane.b32.xlu0 %v458, 1
        %v668 = vpop.permute.xlu0 %667
        %669 = vrot.lane.b32.xlu0 %v459, 1
        %v670 = vpop.permute.xlu0 %669
        %671 = vrot.lane.b32.xlu0 %v460, 1
        %v672 = vpop.permute.xlu0 %671
        %673 = vrot.lane.b32.xlu0 %v461, 1
        %v674 = vpop.permute.xlu0 %673
        %675 = vrot.lane.b32.xlu0 %v462, 1
        %v676 = vpop.permute.xlu0 %675
        %677 = vrot.lane.b32.xlu0 %v463, 1
        %v678 = vpop.permute.xlu0 %677
        %679 = vrot.lane.b32.xlu0 %v464, 1
        %v680 = vpop.permute.xlu0 %679
        %681 = vrot.lane.b32.xlu0 %v465, 1
        %v682 = vpop.permute.xlu0 %681
        %683 = vrot.lane.b32.xlu0 %v466, 1
        %v684 = vpop.permute.xlu0 %683
        %685 = vrot.lane.b32.xlu0 %v467, 1
        %v686 = vpop.permute.xlu0 %685
        %687 = vrot.lane.b32.xlu0 %v468, 1
        %v688 = vpop.permute.xlu0 %687
        %689 = vrot.lane.b32.xlu0 %v469, 1
        %v690 = vpop.permute.xlu0 %689
        %691 = vrot.lane.b32.xlu0 %v470, 1
        %v692 = vpop.permute.xlu0 %691
        %693 = vrot.lane.b32.xlu0 %v471, 1
        %v694 = vpop.permute.xlu0 %693
        %695 = vrot.lane.b32.xlu0 %v472, 1
        %v696 = vpop.permute.xlu0 %695
        %697 = vrot.lane.b32.xlu0 %v473, 1
        %v698 = vpop.permute.xlu0 %697
        %699 = vrot.lane.b32.xlu0 %v474, 1
        %v700 = vpop.permute.xlu0 %699
        %701 = vrot.lane.b32.xlu0 %v475, 1
        %v702 = vpop.permute.xlu0 %701
        %703 = vrot.lane.b32.xlu0 %v476, 1
        %v704 = vpop.permute.xlu0 %703
        %705 = vrot.lane.b32.xlu0 %v477, 1
        %v706 = vpop.permute.xlu0 %705
        %707 = vrot.lane.b32.xlu0 %v478, 1
        %v708 = vpop.permute.xlu0 %707
        %709 = vrot.lane.b32.xlu0 %v479, 1
        %v710 = vpop.permute.xlu0 %709
        %711 = vrot.lane.b32.xlu0 %v480, 1
        %v712 = vpop.permute.xlu0 %711
        %713 = vrot.lane.b32.xlu0 %v481, 1
        %v714 = vpop.permute.xlu0 %713
        %715 = vrot.lane.b32.xlu0 %v482, 1
        %v716 = vpop.permute.xlu0 %715
        %717 = vrot.lane.b32.xlu0 %v483, 1
        %v718 = vpop.permute.xlu0 %717
        %719 = vrot.lane.b32.xlu0 %v484, 1
        %v720 = vpop.permute.xlu0 %719
        %721 = vrot.lane.b32.xlu0 %v485, 1
        %v722 = vpop.permute.xlu0 %721
        %723 = vrot.lane.b32.xlu0 %v486, 1
        %v724 = vpop.permute.xlu0 %723
        %725 = vrot.lane.b32.xlu0 %v487, 1
        %v726 = vpop.permute.xlu0 %725
        %727 = vrot.lane.b32.xlu0 %v488, 1
        %v728 = vpop.permute.xlu0 %727
        %729 = vrot.lane.b32.xlu0 %v489, 1
        %v730 = vpop.permute.xlu0 %729
        %731 = vrot.lane.b32.xlu0 %v490, 1
        %v732 = vpop.permute.xlu0 %731
        %733 = vrot.lane.b32.xlu0 %v491, 1
        %v734 = vpop.permute.xlu0 %733
        %735 = vrot.lane.b32.xlu0 %v492, 1
        %v736 = vpop.permute.xlu0 %735
        %737 = vrot.lane.b32.xlu0 %v493, 1
        %v738 = vpop.permute.xlu0 %737
        %739 = vrot.lane.b32.xlu0 %v494, 1
        %v740 = vpop.permute.xlu0 %739
        %741 = vrot.lane.b32.xlu0 %v495, 1
        %v742 = vpop.permute.xlu0 %741
        %743 = vrot.lane.b32.xlu0 %v496, 1
        %v744 = vpop.permute.xlu0 %743
        %745 = vrot.lane.b32.xlu0 %v497, 1
        %v746 = vpop.permute.xlu0 %745
        %747 = vrot.lane.b32.xlu0 %v498, 1
        %v748 = vpop.permute.xlu0 %747
        %749 = vrot.lane.b32.xlu0 %v499, 1
        %v750 = vpop.permute.xlu0 %749
        %751 = vrot.lane.b32.xlu0 %v500, 1
        %v752 = vpop.permute.xlu0 %751
        %753 = vrot.lane.b32.xlu0 %v501, 1
        %v754 = vpop.permute.xlu0 %753
        %755 = vrot.lane.b32.xlu0 %v502, 1
        %v756 = vpop.permute.xlu0 %755
        %757 = vrot.lane.b32.xlu0 %v503, 1
        %v758 = vpop.permute.xlu0 %757
        %759 = vrot.lane.b32.xlu0 %v504, 1
        %v760 = vpop.permute.xlu0 %759
        %v761 = vsel %vm440, 1, 0
        %vm762 = vcmp.eq.s32.totalorder %v761, 1
        %v763 = vsel %vm762, %v506, %v634
        %v764 = vsel %vm762, %v508, %v636
        %v765 = vsel %vm762, %v510, %v638
        %v766 = vsel %vm762, %v512, %v640
        %v767 = vsel %vm762, %v514, %v642
        %v768 = vsel %vm762, %v516, %v644
        %v769 = vsel %vm762, %v518, %v646
        %v770 = vsel %vm762, %v520, %v648
        %v771 = vsel %vm762, %v522, %v650
        %v772 = vsel %vm762, %v524, %v652
        %v773 = vsel %vm762, %v526, %v654
        %v774 = vsel %vm762, %v528, %v656
        %v775 = vsel %vm762, %v530, %v658
        %v776 = vsel %vm762, %v532, %v660
        %v777 = vsel %vm762, %v534, %v662
        %v778 = vsel %vm762, %v536, %v664
        %v779 = vsel %vm762, %v538, %v666
        %v780 = vsel %vm762, %v540, %v668
        %v781 = vsel %vm762, %v542, %v670
        %v782 = vsel %vm762, %v544, %v672
        %v783 = vsel %vm762, %v546, %v674
        %v784 = vsel %vm762, %v548, %v676
        %v785 = vsel %vm762, %v550, %v678
        %v786 = vsel %vm762, %v552, %v680
        %v787 = vsel %vm762, %v554, %v682
        %v788 = vsel %vm762, %v556, %v684
        %v789 = vsel %vm762, %v558, %v686
        %v790 = vsel %vm762, %v560, %v688
        %v791 = vsel %vm762, %v562, %v690
        %v792 = vsel %vm762, %v564, %v692
        %v793 = vsel %vm762, %v566, %v694
        %v794 = vsel %vm762, %v568, %v696
        %v795 = vsel %vm762, %v570, %v698
        %v796 = vsel %vm762, %v572, %v700
        %v797 = vsel %vm762, %v574, %v702
        %v798 = vsel %vm762, %v576, %v704
        %v799 = vsel %vm762, %v578, %v706
        %v800 = vsel %vm762, %v580, %v708
        %v801 = vsel %vm762, %v582, %v710
        %v802 = vsel %vm762, %v584, %v712
        %v803 = vsel %vm762, %v586, %v714
        %v804 = vsel %vm762, %v588, %v716
        %v805 = vsel %vm762, %v590, %v718
        %v806 = vsel %vm762, %v592, %v720
        %v807 = vsel %vm762, %v594, %v722
        %v808 = vsel %vm762, %v596, %v724
        %v809 = vsel %vm762, %v598, %v726
        %v810 = vsel %vm762, %v600, %v728
        %v811 = vsel %vm762, %v602, %v730
        %v812 = vsel %vm762, %v604, %v732
        %v813 = vsel %vm762, %v606, %v734
        %v814 = vsel %vm762, %v608, %v736
        %v815 = vsel %vm762, %v610, %v738
        %v816 = vsel %vm762, %v612, %v740
        %v817 = vsel %vm762, %v614, %v742
        %v818 = vsel %vm762, %v616, %v744
        %v819 = vsel %vm762, %v618, %v746
        %v820 = vsel %vm762, %v620, %v748
        %v821 = vsel %vm762, %v622, %v750
        %v822 = vsel %vm762, %v624, %v752
        %v823 = vsel %vm762, %v626, %v754
        %v824 = vsel %vm762, %v628, %v756
        %v825 = vsel %vm762, %v630, %v758
        %v826 = vsel %vm762, %v632, %v760
        %v827 = vmul.f32 %v441, %v410
        %v828 = vmul.f32 %v442, %v411
        %v829 = vmul.f32 %v443, %v412
        %v830 = vmul.f32 %v444, %v413
        %v831 = vmul.f32 %v445, %v414
        %v832 = vmul.f32 %v446, %v415
        %v833 = vmul.f32 %v447, %v416
        %v834 = vmul.f32 %v448, %v417
        %v835 = vmul.f32 %v449, %v410
        %v836 = vmul.f32 %v450, %v411
        %v837 = vmul.f32 %v451, %v412
        %v838 = vmul.f32 %v452, %v413
        %v839 = vmul.f32 %v453, %v414
        %v840 = vmul.f32 %v454, %v415
        %v841 = vmul.f32 %v455, %v416
        %v842 = vmul.f32 %v456, %v417
        %v843 = vmul.f32 %v457, %v410
        %v844 = vmul.f32 %v458, %v411
        %v845 = vmul.f32 %v459, %v412
        %v846 = vmul.f32 %v460, %v413
        %v847 = vmul.f32 %v461, %v414
        %v848 = vmul.f32 %v462, %v415
        %v849 = vmul.f32 %v463, %v416
        %v850 = vmul.f32 %v464, %v417
        %v851 = vmul.f32 %v465, %v410
        %v852 = vmul.f32 %v466, %v411
        %v853 = vmul.f32 %v467, %v412
        %v854 = vmul.f32 %v468, %v413
        %v855 = vmul.f32 %v469, %v414
        %v856 = vmul.f32 %v470, %v415
        %v857 = vmul.f32 %v471, %v416
        %v858 = vmul.f32 %v472, %v417
        %v859 = vmul.f32 %v473, %v410
        %v860 = vmul.f32 %v474, %v411
        %v861 = vmul.f32 %v475, %v412
        %v862 = vmul.f32 %v476, %v413
        %v863 = vmul.f32 %v477, %v414
        %v864 = vmul.f32 %v478, %v415
        %v865 = vmul.f32 %v479, %v416
        %v866 = vmul.f32 %v480, %v417
        %v867 = vmul.f32 %v481, %v410
        %v868 = vmul.f32 %v482, %v411
        %v869 = vmul.f32 %v483, %v412
        %v870 = vmul.f32 %v484, %v413
        %v871 = vmul.f32 %v485, %v414
        %v872 = vmul.f32 %v486, %v415
        %v873 = vmul.f32 %v487, %v416
        %v874 = vmul.f32 %v488, %v417
        %v875 = vmul.f32 %v489, %v410
        %v876 = vmul.f32 %v490, %v411
        %v877 = vmul.f32 %v491, %v412
        %v878 = vmul.f32 %v492, %v413
        %v879 = vmul.f32 %v493, %v414
        %v880 = vmul.f32 %v494, %v415
        %v881 = vmul.f32 %v495, %v416
        %v882 = vmul.f32 %v496, %v417
        %v883 = vmul.f32 %v497, %v410
        %v884 = vmul.f32 %v498, %v411
        %v885 = vmul.f32 %v499, %v412
        %v886 = vmul.f32 %v500, %v413
        %v887 = vmul.f32 %v501, %v414
        %v888 = vmul.f32 %v502, %v415
        %v889 = vmul.f32 %v503, %v416
        %v890 = vmul.f32 %v504, %v417
        %v891 = vmul.f32 %v763, %v418
        %v892 = vmul.f32 %v764, %v419
        %v893 = vmul.f32 %v765, %v420
        %v894 = vmul.f32 %v766, %v421
        %v895 = vmul.f32 %v767, %v422
        %v896 = vmul.f32 %v768, %v423
        %v897 = vmul.f32 %v769, %v424
        %v898 = vmul.f32 %v770, %v425
        %v899 = vmul.f32 %v771, %v418
        %v900 = vmul.f32 %v772, %v419
        %v901 = vmul.f32 %v773, %v420
        %v902 = vmul.f32 %v774, %v421
        %v903 = vmul.f32 %v775, %v422
        %v904 = vmul.f32 %v776, %v423
        %v905 = vmul.f32 %v777, %v424
        %v906 = vmul.f32 %v778, %v425
        %v907 = vmul.f32 %v779, %v418
        %v908 = vmul.f32 %v780, %v419
        %v909 = vmul.f32 %v781, %v420
        %v910 = vmul.f32 %v782, %v421
        %v911 = vmul.f32 %v783, %v422
        %v912 = vmul.f32 %v784, %v423
        %v913 = vmul.f32 %v785, %v424
        %v914 = vmul.f32 %v786, %v425
        %v915 = vmul.f32 %v787, %v418
        %v916 = vmul.f32 %v788, %v419
        %v917 = vmul.f32 %v789, %v420
        %v918 = vmul.f32 %v790, %v421
        %v919 = vmul.f32 %v791, %v422
        %v920 = vmul.f32 %v792, %v423
        %v921 = vmul.f32 %v793, %v424
        %v922 = vmul.f32 %v794, %v425
        %v923 = vmul.f32 %v795, %v418
        %v924 = vmul.f32 %v796, %v419
        %v925 = vmul.f32 %v797, %v420
        %v926 = vmul.f32 %v798, %v421
        %v927 = vmul.f32 %v799, %v422
        %v928 = vmul.f32 %v800, %v423
        %v929 = vmul.f32 %v801, %v424
        %v930 = vmul.f32 %v802, %v425
        %v931 = vmul.f32 %v803, %v418
        %v932 = vmul.f32 %v804, %v419
        %v933 = vmul.f32 %v805, %v420
        %v934 = vmul.f32 %v806, %v421
        %v935 = vmul.f32 %v807, %v422
        %v936 = vmul.f32 %v808, %v423
        %v937 = vmul.f32 %v809, %v424
        %v938 = vmul.f32 %v810, %v425
        %v939 = vmul.f32 %v811, %v418
        %v940 = vmul.f32 %v812, %v419
        %v941 = vmul.f32 %v813, %v420
        %v942 = vmul.f32 %v814, %v421
        %v943 = vmul.f32 %v815, %v422
        %v944 = vmul.f32 %v816, %v423
        %v945 = vmul.f32 %v817, %v424
        %v946 = vmul.f32 %v818, %v425
        %v947 = vmul.f32 %v819, %v418
        %v948 = vmul.f32 %v820, %v419
        %v949 = vmul.f32 %v821, %v420
        %v950 = vmul.f32 %v822, %v421
        %v951 = vmul.f32 %v823, %v422
        %v952 = vmul.f32 %v824, %v423
        %v953 = vmul.f32 %v825, %v424
        %v954 = vmul.f32 %v826, %v425
        %v955 = vadd.f32 %v827, %v891
        %v956 = vadd.f32 %v828, %v892
        %v957 = vadd.f32 %v829, %v893
        %v958 = vadd.f32 %v830, %v894
        %v959 = vadd.f32 %v831, %v895
        %v960 = vadd.f32 %v832, %v896
        %v961 = vadd.f32 %v833, %v897
        %v962 = vadd.f32 %v834, %v898
        %v963 = vadd.f32 %v835, %v899
        %v964 = vadd.f32 %v836, %v900
        %v965 = vadd.f32 %v837, %v901
        %v966 = vadd.f32 %v838, %v902
        %v967 = vadd.f32 %v839, %v903
        %v968 = vadd.f32 %v840, %v904
        %v969 = vadd.f32 %v841, %v905
        %v970 = vadd.f32 %v842, %v906
        %v971 = vadd.f32 %v843, %v907
        %v972 = vadd.f32 %v844, %v908
        %v973 = vadd.f32 %v845, %v909
        %v974 = vadd.f32 %v846, %v910
        %v975 = vadd.f32 %v847, %v911
        %v976 = vadd.f32 %v848, %v912
        %v977 = vadd.f32 %v849, %v913
        %v978 = vadd.f32 %v850, %v914
        %v979 = vadd.f32 %v851, %v915
        %v980 = vadd.f32 %v852, %v916
        %v981 = vadd.f32 %v853, %v917
        %v982 = vadd.f32 %v854, %v918
        %v983 = vadd.f32 %v855, %v919
        %v984 = vadd.f32 %v856, %v920
        %v985 = vadd.f32 %v857, %v921
        %v986 = vadd.f32 %v858, %v922
        %v987 = vadd.f32 %v859, %v923
        %v988 = vadd.f32 %v860, %v924
        %v989 = vadd.f32 %v861, %v925
        %v990 = vadd.f32 %v862, %v926
        %v991 = vadd.f32 %v863, %v927
        %v992 = vadd.f32 %v864, %v928
        %v993 = vadd.f32 %v865, %v929
        %v994 = vadd.f32 %v866, %v930
        %v995 = vadd.f32 %v867, %v931
        %v996 = vadd.f32 %v868, %v932
        %v997 = vadd.f32 %v869, %v933
        %v998 = vadd.f32 %v870, %v934
        %v999 = vadd.f32 %v871, %v935
        %v1000 = vadd.f32 %v872, %v936
        %v1001 = vadd.f32 %v873, %v937
        %v1002 = vadd.f32 %v874, %v938
        %v1003 = vadd.f32 %v875, %v939
        %v1004 = vadd.f32 %v876, %v940
        %v1005 = vadd.f32 %v877, %v941
        %v1006 = vadd.f32 %v878, %v942
        %v1007 = vadd.f32 %v879, %v943
        %v1008 = vadd.f32 %v880, %v944
        %v1009 = vadd.f32 %v881, %v945
        %v1010 = vadd.f32 %v882, %v946
        %v1011 = vadd.f32 %v883, %v947
        %v1012 = vadd.f32 %v884, %v948
        %v1013 = vadd.f32 %v885, %v949
        %v1014 = vadd.f32 %v886, %v950
        %v1015 = vadd.f32 %v887, %v951
        %v1016 = vadd.f32 %v888, %v952
        %v1017 = vadd.f32 %v889, %v953
        %v1018 = vadd.f32 %v890, %v954
        %1019 = vst [vmem:[%s396] sm:$0xff] %v955
        %1020 = vst [vmem:[%s396 + $0x8] sm:$0xff] %v956
        %1021 = vst [vmem:[%s396 + $0x10] sm:$0xff] %v957
        %1022 = vst [vmem:[%s396 + $0x18] sm:$0xff] %v958
        %1023 = vst [vmem:[%s396 + $0x20] sm:$0xff] %v959
        %1024 = vst [vmem:[%s396 + $0x28] sm:$0xff] %v960
        %1025 = vst [vmem:[%s396 + $0x30] sm:$0xff] %v961
        %1026 = vst [vmem:[%s396 + $0x38] sm:$0xff] %v962
        %1027 = vst [vmem:[%s396 + $0x40] sm:$0xff] %v963
        %1028 = vst [vmem:[%s396 + $0x48] sm:$0xff] %v964
        %1029 = vst [vmem:[%s396 + $0x50] sm:$0xff] %v965
        %1030 = vst [vmem:[%s396 + $0x58] sm:$0xff] %v966
        %1031 = vst [vmem:[%s396 + $0x60] sm:$0xff] %v967
        %1032 = vst [vmem:[%s396 + $0x68] sm:$0xff] %v968
        %1033 = vst [vmem:[%s396 + $0x70] sm:$0xff] %v969
        %1034 = vst [vmem:[%s396 + $0x78] sm:$0xff] %v970
        %1035 = vst [vmem:[%s396 + $0x80] sm:$0xff] %v971
        %1036 = vst [vmem:[%s396 + $0x88] sm:$0xff] %v972
        %1037 = vst [vmem:[%s396 + $0x90] sm:$0xff] %v973
        %1038 = vst [vmem:[%s396 + $0x98] sm:$0xff] %v974
        %1039 = vst [vmem:[%s396 + $0xa0] sm:$0xff] %v975
        %1040 = vst [vmem:[%s396 + $0xa8] sm:$0xff] %v976
        %1041 = vst [vmem:[%s396 + $0xb0] sm:$0xff] %v977
        %1042 = vst [vmem:[%s396 + $0xb8] sm:$0xff] %v978
        %1043 = vst [vmem:[%s396 + $0xc0] sm:$0xff] %v979
        %1044 = vst [vmem:[%s396 + $0xc8] sm:$0xff] %v980
        %1045 = vst [vmem:[%s396 + $0xd0] sm:$0xff] %v981
        %1046 = vst [vmem:[%s396 + $0xd8] sm:$0xff] %v982
        %1047 = vst [vmem:[%s396 + $0xe0] sm:$0xff] %v983
        %1048 = vst [vmem:[%s396 + $0xe8] sm:$0xff] %v984
        %1049 = vst [vmem:[%s396 + $0xf0] sm:$0xff] %v985
        %1050 = vst [vmem:[%s396 + $0xf8] sm:$0xff] %v986
        %1051 = vst [vmem:[%s396 + $0x100] sm:$0xff] %v987
        %1052 = vst [vmem:[%s396 + $0x108] sm:$0xff] %v988
        %1053 = vst [vmem:[%s396 + $0x110] sm:$0xff] %v989
        %1054 = vst [vmem:[%s396 + $0x118] sm:$0xff] %v990
        %1055 = vst [vmem:[%s396 + $0x120] sm:$0xff] %v991
        %1056 = vst [vmem:[%s396 + $0x128] sm:$0xff] %v992
        %1057 = vst [vmem:[%s396 + $0x130] sm:$0xff] %v993
        %1058 = vst [vmem:[%s396 + $0x138] sm:$0xff] %v994
        %1059 = vst [vmem:[%s396 + $0x140] sm:$0xff] %v995
        %1060 = vst [vmem:[%s396 + $0x148] sm:$0xff] %v996
        %1061 = vst [vmem:[%s396 + $0x150] sm:$0xff] %v997
        %1062 = vst [vmem:[%s396 + $0x158] sm:$0xff] %v998
        %1063 = vst [vmem:[%s396 + $0x160] sm:$0xff] %v999
        %1064 = vst [vmem:[%s396 + $0x168] sm:$0xff] %v1000
        %1065 = vst [vmem:[%s396 + $0x170] sm:$0xff] %v1001
        %1066 = vst [vmem:[%s396 + $0x178] sm:$0xff] %v1002
        %1067 = vst [vmem:[%s396 + $0x180] sm:$0xff] %v1003
        %1068 = vst [vmem:[%s396 + $0x188] sm:$0xff] %v1004
        %1069 = vst [vmem:[%s396 + $0x190] sm:$0xff] %v1005
        %1070 = vst [vmem:[%s396 + $0x198] sm:$0xff] %v1006
        %1071 = vst [vmem:[%s396 + $0x1a0] sm:$0xff] %v1007
        %1072 = vst [vmem:[%s396 + $0x1a8] sm:$0xff] %v1008
        %1073 = vst [vmem:[%s396 + $0x1b0] sm:$0xff] %v1009
        %1074 = vst [vmem:[%s396 + $0x1b8] sm:$0xff] %v1010
        %1075 = vst [vmem:[%s396 + $0x1c0] sm:$0xff] %v1011
        %1076 = vst [vmem:[%s396 + $0x1c8] sm:$0xff] %v1012
        %1077 = vst [vmem:[%s396 + $0x1d0] sm:$0xff] %v1013
        %1078 = vst [vmem:[%s396 + $0x1d8] sm:$0xff] %v1014
        %1079 = vst [vmem:[%s396 + $0x1e0] sm:$0xff] %v1015
        %1080 = vst [vmem:[%s396 + $0x1e8] sm:$0xff] %v1016
        %1081 = vst [vmem:[%s396 + $0x1f0] sm:$0xff] %v1017
        %1082 = vst [vmem:[%s396 + $0x1f8] sm:$0xff] %v1018
        %v1083 = vld [vmem:[%s336] sm:$0xff]
        %v1084 = vld [vmem:[%s336 + $0x8] sm:$0xff]
        %v1085 = vld [vmem:[%s336 + $0x10] sm:$0xff]
        %v1086 = vld [vmem:[%s336 + $0x18] sm:$0xff]
        %v1087 = vld [vmem:[%s336 + $0x20] sm:$0xff]
        %v1088 = vld [vmem:[%s336 + $0x28] sm:$0xff]
        %v1089 = vld [vmem:[%s336 + $0x30] sm:$0xff]
        %v1090 = vld [vmem:[%s336 + $0x38] sm:$0xff]
        %1091 = vrot.lane.b32.xlu0 %v1083, 127
        %v1092 = vpop.permute.xlu0 %1091
        %1093 = vrot.lane.b32.xlu0 %v1084, 127
        %v1094 = vpop.permute.xlu0 %1093
        %1095 = vrot.lane.b32.xlu0 %v1085, 127
        %v1096 = vpop.permute.xlu0 %1095
        %1097 = vrot.lane.b32.xlu0 %v1086, 127
        %v1098 = vpop.permute.xlu0 %1097
        %1099 = vrot.lane.b32.xlu0 %v1087, 127
        %v1100 = vpop.permute.xlu0 %1099
        %1101 = vrot.lane.b32.xlu0 %v1088, 127
        %v1102 = vpop.permute.xlu0 %1101
        %1103 = vrot.lane.b32.xlu0 %v1089, 127
        %v1104 = vpop.permute.xlu0 %1103
        %1105 = vrot.lane.b32.xlu0 %v1090, 127
        %v1106 = vpop.permute.xlu0 %1105
        %1107 = vrot.lane.b32.xlu0 %v1083, 1
        %v1108 = vpop.permute.xlu0 %1107
        %1109 = vrot.lane.b32.xlu0 %v1084, 1
        %v1110 = vpop.permute.xlu0 %1109
        %1111 = vrot.lane.b32.xlu0 %v1085, 1
        %v1112 = vpop.permute.xlu0 %1111
        %1113 = vrot.lane.b32.xlu0 %v1086, 1
        %v1114 = vpop.permute.xlu0 %1113
        %1115 = vrot.lane.b32.xlu0 %v1087, 1
        %v1116 = vpop.permute.xlu0 %1115
        %1117 = vrot.lane.b32.xlu0 %v1088, 1
        %v1118 = vpop.permute.xlu0 %1117
        %1119 = vrot.lane.b32.xlu0 %v1089, 1
        %v1120 = vpop.permute.xlu0 %1119
        %1121 = vrot.lane.b32.xlu0 %v1090, 1
        %v1122 = vpop.permute.xlu0 %1121
        %v1123 = vsel %vm440, %v1092, %v1108
        %v1124 = vsel %vm440, %v1094, %v1110
        %v1125 = vsel %vm440, %v1096, %v1112
        %v1126 = vsel %vm440, %v1098, %v1114
        %v1127 = vsel %vm440, %v1100, %v1116
        %v1128 = vsel %vm440, %v1102, %v1118
        %v1129 = vsel %vm440, %v1104, %v1120
        %v1130 = vsel %vm440, %v1106, %v1122
        %v1131 = vmul.f32 %v1083, %v410
        %v1132 = vmul.f32 %v1084, %v411
        %v1133 = vmul.f32 %v1085, %v412
        %v1134 = vmul.f32 %v1086, %v413
        %v1135 = vmul.f32 %v1087, %v414
        %v1136 = vmul.f32 %v1088, %v415
        %v1137 = vmul.f32 %v1089, %v416
        %v1138 = vmul.f32 %v1090, %v417
        %v1139 = vmul.f32 %v1123, %v418
        %v1140 = vmul.f32 %v1124, %v419
        %v1141 = vmul.f32 %v1125, %v420
        %v1142 = vmul.f32 %v1126, %v421
        %v1143 = vmul.f32 %v1127, %v422
        %v1144 = vmul.f32 %v1128, %v423
        %v1145 = vmul.f32 %v1129, %v424
        %v1146 = vmul.f32 %v1130, %v425
        %v1147 = vadd.f32 %v1131, %v1139
        %v1148 = vadd.f32 %v1132, %v1140
        %v1149 = vadd.f32 %v1133, %v1141
        %v1150 = vadd.f32 %v1134, %v1142
        %v1151 = vadd.f32 %v1135, %v1143
        %v1152 = vadd.f32 %v1136, %v1144
        %v1153 = vadd.f32 %v1137, %v1145
        %v1154 = vadd.f32 %v1138, %v1146
        %1155 = vst [vmem:[%s403] sm:$0xff] %v1147
        %1156 = vst [vmem:[%s403 + $0x8] sm:$0xff] %v1148
        %1157 = vst [vmem:[%s403 + $0x10] sm:$0xff] %v1149
        %1158 = vst [vmem:[%s403 + $0x18] sm:$0xff] %v1150
        %1159 = vst [vmem:[%s403 + $0x20] sm:$0xff] %v1151
        %1160 = vst [vmem:[%s403 + $0x28] sm:$0xff] %v1152
        %1161 = vst [vmem:[%s403 + $0x30] sm:$0xff] %v1153
        %1162 = vst [vmem:[%s403 + $0x38] sm:$0xff] %v1154
        %s1163 = sand.u32 %s144, 1
        %s1164 = scalar_lea.sflag [#allocation4], %s1163
        %s1165 = sand.u32 %s144, 1
        %s1166 = smul.addr %s1165, 512
        %s1167 = scalar_lea.vmem [#allocation10], %s1166
        %s1168 = sand.u32 %s170, 1
        %s1169 = scalar_lea.sflag [#allocation12], %s1168
        %s1170 = sand.u32 %s170, 1
        %s1171 = smul.addr %s1170, 64
        %s1172 = scalar_lea.vmem [#allocation11], %s1171
        // Predicated region
        $region53: #{tpu_custom_call.1} parent=35 // pred_check
          %p1173 = pneg %p154
        $region54: #{tpu_custom_call.1} parent=35 // pred_check_branch
          %1175 = sbr.rel (%p1173) target = $region56
        $region55: #{tpu_custom_call.1} parent=35 // pred_region
          #allocation16 [shape = 'u32[6]{0}', space=smem, size = 0x18, scoped, tag = 'DMA stride descriptor']
          %s1176 = smul.u32 8, %s32
          %1178 = vsyncadd %s1164, 0
          %s1179 = smul.addr %s1176, 8
          %s1180 = scalar_lea.hbm %s4, %s1179
          %s1182 = sshll.u32 1, 14
          %s1183 = sxor.u32 4294967295, %s1182
          %s1186 = sshll.u32 7, 18
          %s1187 = sxor.u32 4294967295, %s1186
          %s1188 = sand.u32 0, %s1187
          %s1190 = sor.u32 %s1188, 0
          %s1191 = sshll.u32 %s1167, 4
          %s1192 = int_to_ptr.vmem [resolvable:$true] %s1191
          %s1193 = sshll.u32 %s1180, 4
          %s1194 = int_to_ptr.hbm [resolvable:$true] %s1193
          %1200 = sst [smem:[#allocation16]] 1024
          %s1201 = scalar_lea.smem [#allocation16], 1
          %1202 = sst [smem:[%s1201]] 2048
          %s1203 = scalar_lea.smem [#allocation16], 2
          %1204 = sst [smem:[%s1203]] 8
          %s1205 = scalar_lea.smem [#allocation16], 3
          %1206 = sst [smem:[%s1205]] 128
          %s1207 = scalar_lea.smem [#allocation16], 4
          %1208 = sst [smem:[%s1207]] 128
          %s1209 = scalar_lea.smem [#allocation16], 5
          %1210 = sst [smem:[%s1209]] 8
          %1212 = dma.general %s1192, 8192, %s1194, %s1164, [#allocation15], [#allocation16], %s1190, 0
        $region56: #{tpu_custom_call.1} parent=35 // pred_fallthru
          _
        // Predicated region
        $region57: #{tpu_custom_call.1} parent=35 // pred_check
          %p1213 = pneg %p180
        $region58: #{tpu_custom_call.1} parent=35 // pred_check_branch
          %1215 = sbr.rel (%p1213) target = $region60
        $region59: #{tpu_custom_call.1} parent=35 // pred_region
          %s1216 = smul.u32 8, %s32
          %1218 = vsyncadd %s1169, 0
          %s1219 = smul.addr %s1216, 8
          %s1220 = scalar_lea.hbm %s5, %s1219
          %s1221 = sshll.u32 %s1172, 4
          %s1222 = int_to_ptr.vmem [resolvable:$true] %s1221
          %s1223 = sshll.u32 %s1220, 4
          %s1224 = int_to_ptr.hbm [resolvable:$true] %s1223
          %1229 = dma.vmem_to_hbm [thread:$0]  %s1222, 1024, %s1224, %s1169, 128, 128, 8
        $region60: #{tpu_custom_call.1} parent=35 // pred_fallthru
          _
      $region36: #{tpu_custom_call.1} parent=5 // pred_fallthru
        _
      %p1230 = scmp.le.s32.totalorder 2, %s27
      // Predicated region
      $region61: #{tpu_custom_call.1} parent=5 // pred_check
        %p1231 = pneg %p1230
      $region62: #{tpu_custom_call.1} parent=5 // pred_check_branch
        %1233 = sbr.rel (%p1231) target = $region64
      $region63: #{tpu_custom_call.1} parent=5 // pred_region
        %s1234 = ssub.s32 %s27, 2
        // Predicated region
        $region65: #{tpu_custom_call.1} parent=63 // pred_check
          %p1235 = pneg %p160
        $region66: #{tpu_custom_call.1} parent=63 // pred_check_branch
          %1237 = sbr.rel (%p1235) target = $region68
        $region67: #{tpu_custom_call.1} parent=63 // pred_region
          %s1238 = sand.u32 %s145, 1
          %s1239 = scalar_lea.sflag [#allocation4], %s1238
          %s1240 = sand.u32 %s145, 1
          %s1241 = smul.addr %s1240, 512
          %s1242 = scalar_lea.vmem [#allocation10], %s1241
          %1244 = dma.done %s1239, 8192
        $region68: #{tpu_custom_call.1} parent=63 // pred_fallthru
          _
        // Predicated region
        $region69: #{tpu_custom_call.1} parent=63 // pred_check
          %p1245 = pneg %p186
        $region70: #{tpu_custom_call.1} parent=63 // pred_check_branch
          %1247 = sbr.rel (%p1245) target = $region72
        $region71: #{tpu_custom_call.1} parent=63 // pred_region
          %s1248 = sand.u32 %s171, 1
          %s1249 = scalar_lea.sflag [#allocation12], %s1248
          %s1250 = sand.u32 %s171, 1
          %s1251 = smul.addr %s1250, 64
          %s1252 = scalar_lea.vmem [#allocation11], %s1251
          %1254 = dma.done %s1249, 1024
        $region72: #{tpu_custom_call.1} parent=63 // pred_fallthru
          _
      $region64: #{tpu_custom_call.1} parent=5 // pred_fallthru
        _
    $region6: #{tpu_custom_call.1} parent=1 // loop_footer
      %s31 = sadd.s32 1, %s27
    $region7: #{tpu_custom_call.1} parent=1 // loop_footer_branch
      %26 = sbr.rel target = $region3
    $region8: #{tpu_custom_call.1} parent=1 // loop_exit
      _
    %1255 = vsyncpa [#allocation3], 1
    %s1256 = scalar_lea.sflag [#allocation3], 1
    %1257 = vsyncpa %s1256, 1
    %1258 = vsyncpa [#allocation6], 1
    %s1259 = scalar_lea.sflag [#allocation6], 1
    %1260 = vsyncpa %s1259, 1
    %1261 = vsyncpa [#allocation9], 1
    %s1262 = scalar_lea.sflag [#allocation9], 1
    %1263 = vsyncpa %s1262, 1
    %1264 = vsyncpa [#allocation4], 1
    %s1265 = scalar_lea.sflag [#allocation4], 1
    %1266 = vsyncpa %s1265, 1
    %1267 = vsyncpa [#allocation12], 1
    %s1268 = scalar_lea.sflag [#allocation12], 1
    %1269 = vsyncpa %s1268, 1

</llo_original>
